<compile_context>
chip_gen: v5e
topology: v5e:2x2
jax: 0.10.0
libtpu: 0.0.40
codegen_flags: <defaults>
</compile_context>

<pallas_src>
import functools

import jax
import jax.numpy as jnp
from jax.experimental import pallas as pl
from jax.experimental.pallas import tpu as pltpu

_LANE = 128


def _round_up(v, m):
    return ((v + m - 1) // m) * m


# ----------------------------- fused kernel ----------------------------------


def _drcgcn_fused_kernel(nlayers, gamma_ref, x_ref, a_ref, w0_ref, b0_ref,
                         convm_ref, ws_ref, bs_ref, o_ref):
    cdt = a_ref.dtype          # MXU operand dtype (f32 or bf16); accum stays f32

    # init_dim_reduction:  X = X_in @ W0 + b0
    x = (jnp.dot(x_ref[...], w0_ref[...], preferred_element_type=jnp.float32)
         + b0_ref[...])
    outputs = x                                  # outputs = zeros(...) + X
    a = a_ref[...]

    # DRCGC layers (unrolled).  M_i = (1-beta_i) I + beta_i W_i precomputed
    # host-side -> two MXU dots + one VPU axpy per layer.
    for i in range(nlayers):
        ax = jnp.dot(a, x.astype(cdt), preferred_element_type=jnp.float32)
        outputs = outputs + jnp.dot(ax.astype(cdt), convm_ref[i],
                                    preferred_element_type=jnp.float32)
        x = gamma_ref[i] * (x - ax)              # next_x

    # sorter + log_softmax over a lane-dense (N, 128) slab.  Padded ws columns
    # are 0 and padded bs entries are -1e30, so padded logits never win the max
    # and exp() of them is exactly 0: the real-class log-softmax is untouched.
    logits = (jnp.dot(outputs.astype(cdt), ws_ref[...],
                      preferred_element_type=jnp.float32) + bs_ref[...])
    mx = jnp.max(logits, axis=1, keepdims=True)
    shifted = logits - mx
    lse = jnp.log(jnp.sum(jnp.exp(shifted), axis=1, keepdims=True))
    o_ref[...] = shifted - lse


def drcgcn_forward(params, x, a, nlayers, tau, *, compute_dtype=jnp.float32):
    """Fused DRCGCN forward (eval mode).  compute_dtype=bf16 -> bf16 MXU path."""
    n, nfeat = x.shape
    h = params["w0"].shape[1]
    c = params["ws"].shape[1]

    f_pad = max(_LANE, _round_up(nfeat, _LANE))   # lane-dense input features
    h_pad = max(_LANE, _round_up(h, _LANE))       # lane-dense hidden dim
    c_pad = _LANE                                 # lane-dense logits slab

    gamma = jnp.concatenate(
        [g.reshape(1).astype(jnp.float32) for g in params["conv_gamma"]])

    # Fold the layer identity in host-side:  M_i = (1-beta_i) I + beta_i W_i,
    # zero-padded so padded output columns stay exactly zero.
    eye = jnp.eye(h, dtype=jnp.float32)
    conv_m = jnp.stack([
        jnp.zeros((h_pad, h_pad), jnp.float32).at[:h, :h].set(
            (1.0 - tau / (i + 1)) * eye
            + (tau / (i + 1)) * params["conv_w"][i].astype(jnp.float32))
        for i in range(nlayers)])                                  # (L, Hp, Hp)

    w0_pad = jnp.zeros((f_pad, h_pad), jnp.float32).at[:nfeat, :h].set(
        params["w0"])
    b0_pad = jnp.zeros((1, h_pad), jnp.float32).at[0, :h].set(params["b0"])
    ws_pad = jnp.zeros((h_pad, c_pad), jnp.float32).at[:h, :c].set(params["ws"])
    bs_pad = jnp.full((1, c_pad), -1e30, jnp.float32).at[0, :c].set(params["bs"])
    x_pad = jnp.zeros((n, f_pad), jnp.float32).at[:, :nfeat].set(
        x.astype(jnp.float32))

    # MXU operands in the compute dtype; biases stay f32 (added to f32 accums).
    cdt = jnp.dtype(compute_dtype)
    x_pad = x_pad.astype(cdt)
    a_c = a.astype(cdt)
    w0_pad = w0_pad.astype(cdt)
    conv_m = conv_m.astype(cdt)
    ws_pad = ws_pad.astype(cdt)

    # Cost estimate + explicit VMEM budget (sized from resident buffers).
    itemsize = cdt.itemsize
    resident_bytes = int(
        (x_pad.size + a_c.size + w0_pad.size + conv_m.size + ws_pad.size)
        * itemsize
        + (b0_pad.size + bs_pad.size + gamma.size) * 4
        + n * c_pad * 4              # output slab
        + 6 * n * h_pad * 4)         # live f32 activations (x, ax, outputs, tmp)
    vmem_limit = int(min(64 * 2**20, max(4 * resident_bytes, 32 * 2**20)))

    flops = int(2 * n * f_pad * h_pad
                + nlayers * (2 * n * n * h_pad + 2 * n * h_pad * h_pad
                             + 3 * n * h_pad)
                + 2 * n * h_pad * c_pad + 4 * n * c_pad)
    transcendentals = int(n * c_pad + n)          # exp per logit + log per row

    kernel = functools.partial(_drcgcn_fused_kernel, nlayers)
    vmem_spec = pl.BlockSpec(memory_space=pltpu.MemorySpace.VMEM)
    smem_spec = pl.BlockSpec(memory_space=pltpu.MemorySpace.SMEM)

    out_padded = pl.pallas_call(
        kernel,
        out_shape=jax.ShapeDtypeStruct((n, c_pad), jnp.float32),
        in_specs=[
            smem_spec,      # gamma   (L,)
            vmem_spec,      # X       (N, Fp)
            vmem_spec,      # A       (N, N)
            vmem_spec,      # W0      (Fp, Hp)
            vmem_spec,      # b0      (1, Hp)      f32
            vmem_spec,      # conv_M  (L, Hp, Hp)
            vmem_spec,      # Ws_pad  (Hp, 128)
            vmem_spec,      # bs_pad  (1, 128)     f32
        ],
        out_specs=vmem_spec,
        compiler_params=pltpu.CompilerParams(vmem_limit_bytes=vmem_limit),
        cost_estimate=pl.CostEstimate(
            flops=flops,
            transcendentals=transcendentals,
            bytes_accessed=resident_bytes),
    )(gamma, x_pad, a_c, w0_pad, b0_pad, conv_m, ws_pad, bs_pad)

    return out_padded[:, :c]


# ------------------------------ reference ------------------------------------


def drcgcn_reference(params, x, a, nlayers, tau):
    # pure-JAX reference (mirrors the PyTorch module's forward exactly)
    h = params["ws"].shape[0]
    eye = jnp.eye(h, dtype=jnp.float32)
    x = x @ params["w0"] + params["b0"]
    outputs = x
    for i in range(nlayers):
        beta = tau / (i + 1)
        ax = a @ x
        nxt = params["conv_gamma"][i][0] * (x - ax)
        m = (1.0 - beta) * eye + beta * params["conv_w"][i]
        outputs = outputs + ax @ m
        x = nxt
    logits = outputs @ params["ws"] + params["bs"]
    return jax.nn.log_softmax(logits, axis=1)


# ------------------------------- main ----------------------------------------

if __name__ == "__main__":
    # small shapes consistent with the module
    N = 32        # number of graph nodes
    NFEAT = 64
    NHIDDEN = 32
    NCLASS = 8
    NLAYERS = 3
    TAU = 0.5

    key = jax.random.PRNGKey(0)
    k = iter(jax.random.split(key, 16))

    # Deterministic parameter init.
    # init_dim_reduction / sorter: PyTorch Linear-style uniform(-1/sqrt(fan_in), ..).
    # Note: the module's reset_parameters() zeroes gamma and W of every DRCGCLayer;
    # we use small nonzero values here so the full compute path is exercised.
    def lin_init(kw, kb, fan_in, fan_out):
        bound = 1.0 / jnp.sqrt(jnp.float32(fan_in))
        w = jax.random.uniform(kw, (fan_in, fan_out), jnp.float32, -bound, bound)
        b = jax.random.uniform(kb, (fan_out,), jnp.float32, -bound, bound)
        return w, b

    w0, b0 = lin_init(next(k), next(k), NFEAT, NHIDDEN)
    ws, bs = lin_init(next(k), next(k), NHIDDEN, NCLASS)
    conv_w = [0.1 * jax.random.normal(next(k), (NHIDDEN, NHIDDEN), jnp.float32)
              for _ in range(NLAYERS)]
    conv_gamma = [0.1 * jax.random.normal(next(k), (1,), jnp.float32)
                  for _ in range(NLAYERS)]

    params = {"w0": w0, "b0": b0, "ws": ws, "bs": bs,
              "conv_w": conv_w, "conv_gamma": conv_gamma}

    # inputs: node features X [N, NFEAT]; dense row-normalized adjacency A [N, N]
    x = jax.random.normal(next(k), (N, NFEAT), jnp.float32)
    a_raw = jax.random.uniform(next(k), (N, N), jnp.float32)
    a = a_raw / jnp.sum(a_raw, axis=1, keepdims=True)

    ref = drcgcn_reference(params, x, a, NLAYERS, TAU)

    # f32 MXU path: bit-close to the f32 reference.
    out = jax.block_until_ready(drcgcn_forward(params, x, a, NLAYERS, TAU))
    assert out.shape == (N, NCLASS)
    assert jnp.allclose(out, ref, rtol=1e-3, atol=1e-3), (
        float(jnp.max(jnp.abs(out - ref))))

    # bf16 MXU path (f32 accumulation): the fast path on v5e/v6e/v7x.
    out_bf16 = jax.block_until_ready(
        drcgcn_forward(params, x, a, NLAYERS, TAU, compute_dtype=jnp.bfloat16))
    assert out_bf16.shape == (N, NCLASS)
    assert bool(jnp.all(jnp.isfinite(out_bf16)))
    assert jnp.allclose(out_bf16, ref, rtol=5e-2, atol=1e-1), (
        float(jnp.max(jnp.abs(out_bf16 - ref))))

    print("KERNEL_OK")
</pallas_src>

<mosaic_0001>
module attributes {stable_mosaic.version = 11 : i64} {
  func.func @_drcgcn_fused_kernel(%arg0: memref<3xf32, #tpu.memory_space<smem>>, %arg1: memref<32x128xf32, #tpu.memory_space<vmem>>, %arg2: memref<32x32xf32, #tpu.memory_space<vmem>>, %arg3: memref<128x128xf32, #tpu.memory_space<vmem>>, %arg4: memref<1x128xf32, #tpu.memory_space<vmem>>, %arg5: memref<3x128x128xf32, #tpu.memory_space<vmem>>, %arg6: memref<128x128xf32, #tpu.memory_space<vmem>>, %arg7: memref<1x128xf32, #tpu.memory_space<vmem>>, %arg8: memref<32x128xf32, #tpu.memory_space<vmem>>) attributes {dimension_semantics = [], scalar_prefetch = 0 : i64, scratch_operands = 0 : i64, tpu.core_type = #tpu.core_type<tc>} {
    %c0 = arith.constant 0 : index
    %c0_0 = arith.constant 0 : index
    %0 = vector.load %arg1[%c0, %c0_0] : memref<32x128xf32, #tpu.memory_space<vmem>>, vector<32x128xf32>
    %c0_1 = arith.constant 0 : index
    %c0_2 = arith.constant 0 : index
    %1 = vector.load %arg3[%c0_1, %c0_2] : memref<128x128xf32, #tpu.memory_space<vmem>>, vector<128x128xf32>
    %cst = arith.constant dense<0.000000e+00> : vector<32x128xf32>
    %2 = tpu.matmul %0, %1, %cst {dimension_numbers = #tpu.dot_dimension_numbers<[1], [0], [0], [1], [0, 0, 1, 1], [], []>} : vector<32x128xf32>, vector<128x128xf32>, vector<32x128xf32> -> vector<32x128xf32>
    %c0_3 = arith.constant 0 : index
    %c0_4 = arith.constant 0 : index
    %3 = vector.load %arg4[%c0_3, %c0_4] : memref<1x128xf32, #tpu.memory_space<vmem>>, vector<1x128xf32>
    %4 = vector.broadcast %3 : vector<1x128xf32> to vector<32x128xf32>
    %5 = arith.addf %2, %4 : vector<32x128xf32>
    %c0_5 = arith.constant 0 : index
    %c0_6 = arith.constant 0 : index
    %6 = vector.load %arg2[%c0_5, %c0_6] : memref<32x32xf32, #tpu.memory_space<vmem>>, vector<32x32xf32>
    %cst_7 = arith.constant dense<0.000000e+00> : vector<32x128xf32>
    %7 = tpu.matmul %6, %5, %cst_7 {dimension_numbers = #tpu.dot_dimension_numbers<[1], [0], [0], [1], [0, 0, 1, 1], [], []>} : vector<32x32xf32>, vector<32x128xf32>, vector<32x128xf32> -> vector<32x128xf32>
    %c0_8 = arith.constant 0 : index
    %c0_9 = arith.constant 0 : index
    %c0_10 = arith.constant 0 : index
    %8 = vector.load %arg5[%c0_8, %c0_9, %c0_10] : memref<3x128x128xf32, #tpu.memory_space<vmem>>, vector<1x128x128xf32>
    %9 = vector.shape_cast %8 : vector<1x128x128xf32> to vector<128x128xf32>
    %cst_11 = arith.constant dense<0.000000e+00> : vector<32x128xf32>
    %10 = tpu.matmul %7, %9, %cst_11 {dimension_numbers = #tpu.dot_dimension_numbers<[1], [0], [0], [1], [0, 0, 1, 1], [], []>} : vector<32x128xf32>, vector<128x128xf32>, vector<32x128xf32> -> vector<32x128xf32>
    %11 = arith.addf %5, %10 : vector<32x128xf32>
    %c0_12 = arith.constant 0 : index
    %12 = memref.load %arg0[%c0_12] : memref<3xf32, #tpu.memory_space<smem>>
    %13 = arith.subf %5, %7 : vector<32x128xf32>
    %14 = vector.broadcast %12 : f32 to vector<32x128xf32>
    %15 = arith.mulf %14, %13 : vector<32x128xf32>
    %cst_13 = arith.constant dense<0.000000e+00> : vector<32x128xf32>
    %16 = tpu.matmul %6, %15, %cst_13 {dimension_numbers = #tpu.dot_dimension_numbers<[1], [0], [0], [1], [0, 0, 1, 1], [], []>} : vector<32x32xf32>, vector<32x128xf32>, vector<32x128xf32> -> vector<32x128xf32>
    %c1 = arith.constant 1 : index
    %c0_14 = arith.constant 0 : index
    %c0_15 = arith.constant 0 : index
    %17 = vector.load %arg5[%c1, %c0_14, %c0_15] : memref<3x128x128xf32, #tpu.memory_space<vmem>>, vector<1x128x128xf32>
    %18 = vector.shape_cast %17 : vector<1x128x128xf32> to vector<128x128xf32>
    %cst_16 = arith.constant dense<0.000000e+00> : vector<32x128xf32>
    %19 = tpu.matmul %16, %18, %cst_16 {dimension_numbers = #tpu.dot_dimension_numbers<[1], [0], [0], [1], [0, 0, 1, 1], [], []>} : vector<32x128xf32>, vector<128x128xf32>, vector<32x128xf32> -> vector<32x128xf32>
    %20 = arith.addf %11, %19 : vector<32x128xf32>
    %c1_17 = arith.constant 1 : index
    %21 = memref.load %arg0[%c1_17] : memref<3xf32, #tpu.memory_space<smem>>
    %22 = arith.subf %15, %16 : vector<32x128xf32>
    %23 = vector.broadcast %21 : f32 to vector<32x128xf32>
    %24 = arith.mulf %23, %22 : vector<32x128xf32>
    %cst_18 = arith.constant dense<0.000000e+00> : vector<32x128xf32>
    %25 = tpu.matmul %6, %24, %cst_18 {dimension_numbers = #tpu.dot_dimension_numbers<[1], [0], [0], [1], [0, 0, 1, 1], [], []>} : vector<32x32xf32>, vector<32x128xf32>, vector<32x128xf32> -> vector<32x128xf32>
    %c2 = arith.constant 2 : index
    %c0_19 = arith.constant 0 : index
    %c0_20 = arith.constant 0 : index
    %26 = vector.load %arg5[%c2, %c0_19, %c0_20] : memref<3x128x128xf32, #tpu.memory_space<vmem>>, vector<1x128x128xf32>
    %27 = vector.shape_cast %26 : vector<1x128x128xf32> to vector<128x128xf32>
    %cst_21 = arith.constant dense<0.000000e+00> : vector<32x128xf32>
    %28 = tpu.matmul %25, %27, %cst_21 {dimension_numbers = #tpu.dot_dimension_numbers<[1], [0], [0], [1], [0, 0, 1, 1], [], []>} : vector<32x128xf32>, vector<128x128xf32>, vector<32x128xf32> -> vector<32x128xf32>
    %29 = arith.addf %20, %28 : vector<32x128xf32>
    %c0_22 = arith.constant 0 : index
    %c0_23 = arith.constant 0 : index
    %30 = vector.load %arg6[%c0_22, %c0_23] : memref<128x128xf32, #tpu.memory_space<vmem>>, vector<128x128xf32>
    %cst_24 = arith.constant dense<0.000000e+00> : vector<32x128xf32>
    %31 = tpu.matmul %29, %30, %cst_24 {dimension_numbers = #tpu.dot_dimension_numbers<[1], [0], [0], [1], [0, 0, 1, 1], [], []>} : vector<32x128xf32>, vector<128x128xf32>, vector<32x128xf32> -> vector<32x128xf32>
    %c0_25 = arith.constant 0 : index
    %c0_26 = arith.constant 0 : index
    %32 = vector.load %arg7[%c0_25, %c0_26] : memref<1x128xf32, #tpu.memory_space<vmem>>, vector<1x128xf32>
    %33 = vector.broadcast %32 : vector<1x128xf32> to vector<32x128xf32>
    %34 = arith.addf %31, %33 : vector<32x128xf32>
    %cst_27 = arith.constant dense<0xFF800000> : vector<32xf32>
    %35 = vector.multi_reduction <maximumf>, %34, %cst_27 [1] : vector<32x128xf32> to vector<32xf32>
    %36 = vector.shape_cast %35 : vector<32xf32> to vector<32x1xf32>
    %37 = vector.broadcast %36 : vector<32x1xf32> to vector<32x128xf32>
    %38 = arith.subf %34, %37 : vector<32x128xf32>
    %39 = math.exp %38 : vector<32x128xf32>
    %cst_28 = arith.constant dense<0.000000e+00> : vector<32xf32>
    %40 = vector.multi_reduction <add>, %39, %cst_28 [1] : vector<32x128xf32> to vector<32xf32>
    %41 = vector.shape_cast %40 : vector<32xf32> to vector<32x1xf32>
    %42 = math.log %41 : vector<32x1xf32>
    %43 = vector.broadcast %42 : vector<32x1xf32> to vector<32x128xf32>
    %44 = arith.subf %38, %43 : vector<32x128xf32>
    %c0_29 = arith.constant 0 : index
    %c0_30 = arith.constant 0 : index
    %45 = vector.load %arg8[%c0_29, %c0_30] : memref<32x128xf32, #tpu.memory_space<vmem>>, vector<32x128xf32>
    tpu.vector_store %arg8[%c0_29, %c0_30], %44 {strides = array<i32>} : memref<32x128xf32, #tpu.memory_space<vmem>>, vector<32x128xf32>,
    return
  }
}

</mosaic_0001>

<llo_original>
// kernel: tpu_custom_call.1
$region0: #{tpu_custom_call.1}
  #allocation0 [shape = 'u32[]', space=smem, size = 0x4, offset = 0x4, fixed_abs, tag = 'smem constant byte address 0x4 - core index']
  #allocation1 [shape = 'u32[72,128]{1,0:T(1,128)}', space=vmem, size = 0x9000, scoped, tag = 'internal scratch']
  %s0 = inlined_call_operand.hbm [shape: f32[3], index: 0, kind: input, shape index: {}]
  %s1 = inlined_call_operand.hbm [shape: f32[32,128], index: 1, kind: input, shape index: {}]
  %s2 = inlined_call_operand.hbm [shape: f32[32,32], index: 2, kind: input, shape index: {}]
  %s3 = inlined_call_operand.hbm [shape: f32[128,128], index: 3, kind: input, shape index: {}]
  %s4 = inlined_call_operand.vmem [shape: f32[1,128], index: 4, kind: input, shape index: {}]
  %s5 = inlined_call_operand.hbm [shape: f32[3,128,128], index: 5, kind: input, shape index: {}]
  %s6 = inlined_call_operand.hbm [shape: f32[128,128], index: 6, kind: input, shape index: {}]
  %s7 = inlined_call_operand.vmem [shape: f32[1,128], index: 7, kind: input, shape index: {}]
  %s8 = inlined_call_operand.hbm [shape: f32[32,128], index: 8, kind: output, shape index: {}]
  %s9 = sld [smem:[#allocation0]]
  $region66: #{tpu_custom_call.1} parent=0
    _
  %s11 = ssub.s32 1, %s9
  %s12 = scalar_select 0, %s11, %s9
  $region1: #{tpu_custom_call.1} parent=0
    #allocation2 [shape = 'u8[512]{0}', space=smem, size = 0x200, scoped, tag = 'input window, operand 0, single buffered']
    #allocation3 [shape = 's32[1]{0}', space=sflag, size = 0x4, scoped, tag = 'scoped memory for tpu_custom_call.1']
    #allocation4 [shape = 's32[1]{0}', space=sflag, size = 0x4, scoped, tag = 'scoped memory for tpu_custom_call.1']
    #allocation5 [shape = 's32[1]{0}', space=sflag, size = 0x4, scoped, tag = 'scoped memory for tpu_custom_call.1']
    #allocation6 [shape = 'u8[16384]{0}', space=vmem, size = 0x4000, scoped, tag = 'input window, operand 1, single buffered']
    #allocation7 [shape = 'u8[16384]{0}', space=vmem, size = 0x4000, scoped, tag = 'input window, operand 2, single buffered']
    #allocation8 [shape = 's32[1]{0}', space=sflag, size = 0x4, scoped, tag = 'scoped memory for tpu_custom_call.1']
    #allocation9 [shape = 'u8[65536]{0}', space=vmem, size = 0x10000, scoped, tag = 'input window, operand 3, single buffered']
    #allocation10 [shape = 'u8[196608]{0}', space=vmem, size = 0x30000, scoped, tag = 'input window, operand 5, single buffered']
    #allocation11 [shape = 's32[1]{0}', space=sflag, size = 0x4, scoped, tag = 'scoped memory for tpu_custom_call.1']
    #allocation12 [shape = 'u8[65536]{0}', space=vmem, size = 0x10000, scoped, tag = 'input window, operand 6, single buffered']
    #allocation13 [shape = 'u8[16384]{0}', space=vmem, size = 0x4000, scoped, tag = 'output window, operand 0, single buffered']
    %13 = vsyncpa [#allocation5], 0
    %14 = vsyncpa [#allocation3], 0
    %15 = vsyncpa [#allocation8], 0
    %16 = vsyncpa [#allocation11], 0
    %17 = vsyncpa [#allocation4], 0
    // Predicated region
    $region2: #{tpu_custom_call.1} parent=1 // pred_check
      _
    $region3: #{tpu_custom_call.1} parent=1 // pred_check_branch
      %19 = sbr.rel (0) target = $region5
    $region4: #{tpu_custom_call.1} parent=1 // pred_region
      %21 = vsyncadd [#allocation5], 0
      %s23 = sshll.u32 %s0, 4
      %s24 = int_to_ptr.hbm [resolvable:$true] %s23
      %26 = dma.hbm_to_smem %s24, 16, [#allocation2], [#allocation5]
    $region5: #{tpu_custom_call.1} parent=1 // pred_fallthru
      _
    // Predicated region
    $region6: #{tpu_custom_call.1} parent=1 // pred_check
      _
    $region7: #{tpu_custom_call.1} parent=1 // pred_check_branch
      %28 = sbr.rel (0) target = $region9
    $region8: #{tpu_custom_call.1} parent=1 // pred_region
      %30 = vsyncadd [#allocation3], 0
      %s31 = sshll.u32 %s1, 4
      %s32 = int_to_ptr.hbm [resolvable:$true] %s31
      %s33 = sshll.u32 [#allocation6], 4
      %s34 = int_to_ptr.vmem [resolvable:$true] %s33
      %39 = dma.hbm_to_vmem [thread:$0]  %s32, 512, %s34, [#allocation3], 128, 128, 8
    $region9: #{tpu_custom_call.1} parent=1 // pred_fallthru
      _
    // Predicated region
    $region10: #{tpu_custom_call.1} parent=1 // pred_check
      _
    $region11: #{tpu_custom_call.1} parent=1 // pred_check_branch
      %41 = sbr.rel (0) target = $region13
    $region12: #{tpu_custom_call.1} parent=1 // pred_region
      %43 = vsyncadd [#allocation8], 0
      %s44 = sshll.u32 %s2, 4
      %s45 = int_to_ptr.hbm [resolvable:$true] %s44
      %s46 = sshll.u32 [#allocation7], 4
      %s47 = int_to_ptr.vmem [resolvable:$true] %s46
      %52 = dma.hbm_to_vmem [thread:$0]  %s45, 512, %s47, [#allocation8], 128, 128, 8
    $region13: #{tpu_custom_call.1} parent=1 // pred_fallthru
      _
    // Predicated region
    $region14: #{tpu_custom_call.1} parent=1 // pred_check
      _
    $region15: #{tpu_custom_call.1} parent=1 // pred_check_branch
      %54 = sbr.rel (0) target = $region17
    $region16: #{tpu_custom_call.1} parent=1 // pred_region
      %56 = vsyncadd [#allocation8], 0
      %s57 = sshll.u32 %s3, 4
      %s58 = int_to_ptr.hbm [resolvable:$true] %s57
      %s59 = sshll.u32 [#allocation9], 4
      %s60 = int_to_ptr.vmem [resolvable:$true] %s59
      %65 = dma.hbm_to_vmem [thread:$0]  %s58, 2048, %s60, [#allocation8], 128, 128, 8
    $region17: #{tpu_custom_call.1} parent=1 // pred_fallthru
      _
    // Predicated region
    $region18: #{tpu_custom_call.1} parent=1 // pred_check
      _
    $region19: #{tpu_custom_call.1} parent=1 // pred_check_branch
      %67 = sbr.rel (0) target = $region21
    $region20: #{tpu_custom_call.1} parent=1 // pred_region
      _
    $region21: #{tpu_custom_call.1} parent=1 // pred_fallthru
      _
    // Predicated region
    $region22: #{tpu_custom_call.1} parent=1 // pred_check
      _
    $region23: #{tpu_custom_call.1} parent=1 // pred_check_branch
      %69 = sbr.rel (0) target = $region25
    $region24: #{tpu_custom_call.1} parent=1 // pred_region
      %71 = vsyncadd [#allocation11], 0
      %s72 = sshll.u32 %s5, 4
      %s73 = int_to_ptr.hbm [resolvable:$true] %s72
      %s74 = sshll.u32 [#allocation10], 4
      %s75 = int_to_ptr.vmem [resolvable:$true] %s74
      %80 = dma.hbm_to_vmem [thread:$0]  %s73, 6144, %s75, [#allocation11], 128, 128, 8
    $region25: #{tpu_custom_call.1} parent=1 // pred_fallthru
      _
    // Predicated region
    $region26: #{tpu_custom_call.1} parent=1 // pred_check
      _
    $region27: #{tpu_custom_call.1} parent=1 // pred_check_branch
      %82 = sbr.rel (0) target = $region29
    $region28: #{tpu_custom_call.1} parent=1 // pred_region
      %84 = vsyncadd [#allocation11], 0
      %s85 = sshll.u32 %s6, 4
      %s86 = int_to_ptr.hbm [resolvable:$true] %s85
      %s87 = sshll.u32 [#allocation12], 4
      %s88 = int_to_ptr.vmem [resolvable:$true] %s87
      %93 = dma.hbm_to_vmem [thread:$0]  %s86, 2048, %s88, [#allocation11], 128, 128, 8
    $region29: #{tpu_custom_call.1} parent=1 // pred_fallthru
      _
    // Predicated region
    $region30: #{tpu_custom_call.1} parent=1 // pred_check
      _
    $region31: #{tpu_custom_call.1} parent=1 // pred_check_branch
      %95 = sbr.rel (0) target = $region33
    $region32: #{tpu_custom_call.1} parent=1 // pred_region
      _
    $region33: #{tpu_custom_call.1} parent=1 // pred_fallthru
      _
    // Predicated region
    $region34: #{tpu_custom_call.1} parent=1 // pred_check
      _
    $region35: #{tpu_custom_call.1} parent=1 // pred_check_branch
      %97 = sbr.rel (0) target = $region37
    $region36: #{tpu_custom_call.1} parent=1 // pred_region
      %99 = dma.done [#allocation5], 16
    $region37: #{tpu_custom_call.1} parent=1 // pred_fallthru
      _
    // Predicated region
    $region38: #{tpu_custom_call.1} parent=1 // pred_check
      _
    $region39: #{tpu_custom_call.1} parent=1 // pred_check_branch
      %101 = sbr.rel (0) target = $region41
    $region40: #{tpu_custom_call.1} parent=1 // pred_region
      %103 = dma.done [#allocation3], 512
    $region41: #{tpu_custom_call.1} parent=1 // pred_fallthru
      _
    // Predicated region
    $region42: #{tpu_custom_call.1} parent=1 // pred_check
      _
    $region43: #{tpu_custom_call.1} parent=1 // pred_check_branch
      %105 = sbr.rel (0) target = $region45
    $region44: #{tpu_custom_call.1} parent=1 // pred_region
      %107 = dma.done [#allocation8], 512
    $region45: #{tpu_custom_call.1} parent=1 // pred_fallthru
      _
    // Predicated region
    $region46: #{tpu_custom_call.1} parent=1 // pred_check
      _
    $region47: #{tpu_custom_call.1} parent=1 // pred_check_branch
      %109 = sbr.rel (0) target = $region49
    $region48: #{tpu_custom_call.1} parent=1 // pred_region
      %111 = dma.done [#allocation8], 2048
    $region49: #{tpu_custom_call.1} parent=1 // pred_fallthru
      _
    // Predicated region
    $region50: #{tpu_custom_call.1} parent=1 // pred_check
      _
    $region51: #{tpu_custom_call.1} parent=1 // pred_check_branch
      %113 = sbr.rel (0) target = $region53
    $region52: #{tpu_custom_call.1} parent=1 // pred_region
      %115 = dma.done [#allocation11], 6144
    $region53: #{tpu_custom_call.1} parent=1 // pred_fallthru
      _
    // Predicated region
    $region54: #{tpu_custom_call.1} parent=1 // pred_check
      _
    $region55: #{tpu_custom_call.1} parent=1 // pred_check_branch
      %117 = sbr.rel (0) target = $region57
    $region56: #{tpu_custom_call.1} parent=1 // pred_region
      %119 = dma.done [#allocation11], 2048
    $region57: #{tpu_custom_call.1} parent=1 // pred_fallthru
      _
    %120 = sfence
    %v121 = vld [vmem:[#allocation6] sm:$0xff]
    %v122 = vld [vmem:[#allocation6 + $0x8] sm:$0xff]
    %v123 = vld [vmem:[#allocation6 + $0x10] sm:$0xff]
    %v124 = vld [vmem:[#allocation6 + $0x18] sm:$0xff]
    %v125 = vld [vmem:[#allocation9] sm:$0xff]
    %v126 = vld [vmem:[#allocation9 + $0x8] sm:$0xff]
    %v127 = vld [vmem:[#allocation9 + $0x10] sm:$0xff]
    %v128 = vld [vmem:[#allocation9 + $0x18] sm:$0xff]
    %v129 = vld [vmem:[#allocation9 + $0x20] sm:$0xff]
    %v130 = vld [vmem:[#allocation9 + $0x28] sm:$0xff]
    %v131 = vld [vmem:[#allocation9 + $0x30] sm:$0xff]
    %v132 = vld [vmem:[#allocation9 + $0x38] sm:$0xff]
    %v133 = vld [vmem:[#allocation9 + $0x40] sm:$0xff]
    %v134 = vld [vmem:[#allocation9 + $0x48] sm:$0xff]
    %v135 = vld [vmem:[#allocation9 + $0x50] sm:$0xff]
    %v136 = vld [vmem:[#allocation9 + $0x58] sm:$0xff]
    %v137 = vld [vmem:[#allocation9 + $0x60] sm:$0xff]
    %v138 = vld [vmem:[#allocation9 + $0x68] sm:$0xff]
    %v139 = vld [vmem:[#allocation9 + $0x70] sm:$0xff]
    %v140 = vld [vmem:[#allocation9 + $0x78] sm:$0xff]
    %v141 = vld [vmem:[%s4] sm:$0x1]
    %v143 = vperm.slane %v141, 0
    %145 = vmatpush.msra.mxu0 %v140
    %146 = vmatpush.msra.mxu0 %v139
    %147 = vmatpush.msra.mxu0 %v138
    %148 = vmatpush.msra.mxu0 %v137
    %149 = vmatpush.msra.mxu0 %v136
    %150 = vmatpush.msra.mxu0 %v135
    %151 = vmatpush.msra.mxu0 %v134
    %152 = vmatpush.msra.mxu0 %v133
    %153 = vmatpush.msra.mxu0 %v132
    %154 = vmatpush.msra.mxu0 %v131
    %155 = vmatpush.msra.mxu0 %v130
    %156 = vmatpush.msra.mxu0 %v129
    %157 = vmatpush.msra.mxu0 %v128
    %158 = vmatpush.msra.mxu0 %v127
    %159 = vmatpush.msra.mxu0 %v126
    %160 = vmatpush.msra.mxu0 %v125
    %161 = vmatmul.f32.gmra.mxu0 %v121
    %v162 = vpop.f32.mrf.mxu0
    %v163 = vadd.f32 %v143, %v162
    %164 = vmatmul.f32.gmra.mxu0 %v122
    %v165 = vpop.f32.mrf.mxu0
    %v166 = vadd.f32 %v143, %v165
    %167 = vmatmul.f32.gmra.mxu0 %v123
    %v168 = vpop.f32.mrf.mxu0
    %v169 = vadd.f32 %v143, %v168
    %170 = vmatmul.f32.gmra.mxu0 %v124
    %v171 = vpop.f32.mrf.mxu0
    %v172 = vadd.f32 %v143, %v171
    %173 = vdwg.mxu0
    %v174 = vld [vmem:[#allocation7] sm:$0xff]
    %v175 = vld [vmem:[#allocation7 + $0x8] sm:$0xff]
    %v176 = vld [vmem:[#allocation7 + $0x10] sm:$0xff]
    %v177 = vld [vmem:[#allocation7 + $0x18] sm:$0xff]
    %vm178 = vcmask 261120
    %v180 = vsel %vm178, %v174, 0
    %v183 = vsel %vm178, %v175, 0
    %v186 = vsel %vm178, %v176, 0
    %v189 = vsel %vm178, %v177, 0
    %191 = vmatpush.msra.mxu0 0.0
    %192 = vmatpush.msra.mxu0 0.0
    %193 = vmatpush.msra.mxu0 0.0
    %194 = vmatpush.msra.mxu0 0.0
    %195 = vmatpush.msra.mxu0 0.0
    %196 = vmatpush.msra.mxu0 0.0
    %197 = vmatpush.msra.mxu0 0.0
    %198 = vmatpush.msra.mxu0 0.0
    %199 = vmatpush.msra.mxu0 0.0
    %200 = vmatpush.msra.mxu0 0.0
    %201 = vmatpush.msra.mxu0 0.0
    %202 = vmatpush.msra.mxu0 0.0
    %203 = vmatpush.msra.mxu0 %v172
    %204 = vmatpush.msra.mxu0 %v169
    %205 = vmatpush.msra.mxu0 %v166
    %206 = vmatpush.msra.mxu0 %v163
    %207 = vmatmul.f32.gmra.mxu0 %v180
    %v208 = vpop.f32.mrf.mxu0
    %v209 = vadd.f32 0.0, %v208
    %210 = vmatmul.f32.gmra.mxu0 %v183
    %v211 = vpop.f32.mrf.mxu0
    %v212 = vadd.f32 0.0, %v211
    %213 = vmatmul.f32.gmra.mxu0 %v186
    %v214 = vpop.f32.mrf.mxu0
    %v215 = vadd.f32 0.0, %v214
    %216 = vmatmul.f32.gmra.mxu0 %v189
    %v217 = vpop.f32.mrf.mxu0
    %v218 = vadd.f32 0.0, %v217
    %219 = vdwg.mxu0
    %v220 = vld [vmem:[#allocation10] sm:$0xff]
    %v221 = vld [vmem:[#allocation10 + $0x8] sm:$0xff]
    %v222 = vld [vmem:[#allocation10 + $0x10] sm:$0xff]
    %v223 = vld [vmem:[#allocation10 + $0x18] sm:$0xff]
    %v224 = vld [vmem:[#allocation10 + $0x20] sm:$0xff]
    %v225 = vld [vmem:[#allocation10 + $0x28] sm:$0xff]
    %v226 = vld [vmem:[#allocation10 + $0x30] sm:$0xff]
    %v227 = vld [vmem:[#allocation10 + $0x38] sm:$0xff]
    %v228 = vld [vmem:[#allocation10 + $0x40] sm:$0xff]
    %v229 = vld [vmem:[#allocation10 + $0x48] sm:$0xff]
    %v230 = vld [vmem:[#allocation10 + $0x50] sm:$0xff]
    %v231 = vld [vmem:[#allocation10 + $0x58] sm:$0xff]
    %v232 = vld [vmem:[#allocation10 + $0x60] sm:$0xff]
    %v233 = vld [vmem:[#allocation10 + $0x68] sm:$0xff]
    %v234 = vld [vmem:[#allocation10 + $0x70] sm:$0xff]
    %v235 = vld [vmem:[#allocation10 + $0x78] sm:$0xff]
    %236 = vmatpush.msra.mxu0 %v235
    %237 = vmatpush.msra.mxu0 %v234
    %238 = vmatpush.msra.mxu0 %v233
    %239 = vmatpush.msra.mxu0 %v232
    %240 = vmatpush.msra.mxu0 %v231
    %241 = vmatpush.msra.mxu0 %v230
    %242 = vmatpush.msra.mxu0 %v229
    %243 = vmatpush.msra.mxu0 %v228
    %244 = vmatpush.msra.mxu0 %v227
    %245 = vmatpush.msra.mxu0 %v226
    %246 = vmatpush.msra.mxu0 %v225
    %247 = vmatpush.msra.mxu0 %v224
    %248 = vmatpush.msra.mxu0 %v223
    %249 = vmatpush.msra.mxu0 %v222
    %250 = vmatpush.msra.mxu0 %v221
    %251 = vmatpush.msra.mxu0 %v220
    %252 = vmatmul.f32.gmra.mxu0 %v209
    %v253 = vpop.f32.mrf.mxu0
    %v254 = vadd.f32 0.0, %v253
    %255 = vmatmul.f32.gmra.mxu0 %v212
    %v256 = vpop.f32.mrf.mxu0
    %v257 = vadd.f32 0.0, %v256
    %258 = vmatmul.f32.gmra.mxu0 %v215
    %v259 = vpop.f32.mrf.mxu0
    %v260 = vadd.f32 0.0, %v259
    %261 = vmatmul.f32.gmra.mxu0 %v218
    %v262 = vpop.f32.mrf.mxu0
    %v263 = vadd.f32 0.0, %v262
    %264 = vdwg.mxu0
    %v265 = vadd.f32 %v163, %v254
    %v266 = vadd.f32 %v166, %v257
    %v267 = vadd.f32 %v169, %v260
    %v268 = vadd.f32 %v172, %v263
    %s269 = sld [smem:[#allocation2]]
    %v270 = vsub.f32 %v163, %v209
    %v271 = vsub.f32 %v166, %v212
    %v272 = vsub.f32 %v169, %v215
    %v273 = vsub.f32 %v172, %v218
    %v274 = vstv %s269
    %v275 = vmul.f32 %v274, %v270
    %v276 = vmul.f32 %v274, %v271
    %v277 = vmul.f32 %v274, %v272
    %v278 = vmul.f32 %v274, %v273
    %279 = vmatpush.msra.mxu0 0.0
    %280 = vmatpush.msra.mxu0 0.0
    %281 = vmatpush.msra.mxu0 0.0
    %282 = vmatpush.msra.mxu0 0.0
    %283 = vmatpush.msra.mxu0 0.0
    %284 = vmatpush.msra.mxu0 0.0
    %285 = vmatpush.msra.mxu0 0.0
    %286 = vmatpush.msra.mxu0 0.0
    %287 = vmatpush.msra.mxu0 0.0
    %288 = vmatpush.msra.mxu0 0.0
    %289 = vmatpush.msra.mxu0 0.0
    %290 = vmatpush.msra.mxu0 0.0
    %291 = vmatpush.msra.mxu0 %v278
    %292 = vmatpush.msra.mxu0 %v277
    %293 = vmatpush.msra.mxu0 %v276
    %294 = vmatpush.msra.mxu0 %v275
    %295 = vmatmul.f32.gmra.mxu0 %v180
    %v296 = vpop.f32.mrf.mxu0
    %v297 = vadd.f32 0.0, %v296
    %298 = vmatmul.f32.gmra.mxu0 %v183
    %v299 = vpop.f32.mrf.mxu0
    %v300 = vadd.f32 0.0, %v299
    %301 = vmatmul.f32.gmra.mxu0 %v186
    %v302 = vpop.f32.mrf.mxu0
    %v303 = vadd.f32 0.0, %v302
    %304 = vmatmul.f32.gmra.mxu0 %v189
    %v305 = vpop.f32.mrf.mxu0
    %v306 = vadd.f32 0.0, %v305
    %307 = vdwg.mxu0
    %s308 = scalar_lea.vmem [#allocation10], 128
    %v309 = vld [vmem:[%s308] sm:$0xff]
    %v310 = vld [vmem:[%s308 + $0x8] sm:$0xff]
    %v311 = vld [vmem:[%s308 + $0x10] sm:$0xff]
    %v312 = vld [vmem:[%s308 + $0x18] sm:$0xff]
    %v313 = vld [vmem:[%s308 + $0x20] sm:$0xff]
    %v314 = vld [vmem:[%s308 + $0x28] sm:$0xff]
    %v315 = vld [vmem:[%s308 + $0x30] sm:$0xff]
    %v316 = vld [vmem:[%s308 + $0x38] sm:$0xff]
    %v317 = vld [vmem:[%s308 + $0x40] sm:$0xff]
    %v318 = vld [vmem:[%s308 + $0x48] sm:$0xff]
    %v319 = vld [vmem:[%s308 + $0x50] sm:$0xff]
    %v320 = vld [vmem:[%s308 + $0x58] sm:$0xff]
    %v321 = vld [vmem:[%s308 + $0x60] sm:$0xff]
    %v322 = vld [vmem:[%s308 + $0x68] sm:$0xff]
    %v323 = vld [vmem:[%s308 + $0x70] sm:$0xff]
    %v324 = vld [vmem:[%s308 + $0x78] sm:$0xff]
    %325 = vmatpush.msra.mxu0 %v324
    %326 = vmatpush.msra.mxu0 %v323
    %327 = vmatpush.msra.mxu0 %v322
    %328 = vmatpush.msra.mxu0 %v321
    %329 = vmatpush.msra.mxu0 %v320
    %330 = vmatpush.msra.mxu0 %v319
    %331 = vmatpush.msra.mxu0 %v318
    %332 = vmatpush.msra.mxu0 %v317
    %333 = vmatpush.msra.mxu0 %v316
    %334 = vmatpush.msra.mxu0 %v315
    %335 = vmatpush.msra.mxu0 %v314
    %336 = vmatpush.msra.mxu0 %v313
    %337 = vmatpush.msra.mxu0 %v312
    %338 = vmatpush.msra.mxu0 %v311
    %339 = vmatpush.msra.mxu0 %v310
    %340 = vmatpush.msra.mxu0 %v309
    %341 = vmatmul.f32.gmra.mxu0 %v297
    %v342 = vpop.f32.mrf.mxu0
    %v343 = vadd.f32 0.0, %v342
    %344 = vmatmul.f32.gmra.mxu0 %v300
    %v345 = vpop.f32.mrf.mxu0
    %v346 = vadd.f32 0.0, %v345
    %347 = vmatmul.f32.gmra.mxu0 %v303
    %v348 = vpop.f32.mrf.mxu0
    %v349 = vadd.f32 0.0, %v348
    %350 = vmatmul.f32.gmra.mxu0 %v306
    %v351 = vpop.f32.mrf.mxu0
    %v352 = vadd.f32 0.0, %v351
    %353 = vdwg.mxu0
    %v354 = vadd.f32 %v265, %v343
    %v355 = vadd.f32 %v266, %v346
    %v356 = vadd.f32 %v267, %v349
    %v357 = vadd.f32 %v268, %v352
    %s358 = sld [smem:[#allocation2 + $0x1]]
    %v359 = vsub.f32 %v275, %v297
    %v360 = vsub.f32 %v276, %v300
    %v361 = vsub.f32 %v277, %v303
    %v362 = vsub.f32 %v278, %v306
    %v363 = vstv %s358
    %v364 = vmul.f32 %v363, %v359
    %v365 = vmul.f32 %v363, %v360
    %v366 = vmul.f32 %v363, %v361
    %v367 = vmul.f32 %v363, %v362
    %368 = vmatpush.msra.mxu0 0.0
    %369 = vmatpush.msra.mxu0 0.0
    %370 = vmatpush.msra.mxu0 0.0
    %371 = vmatpush.msra.mxu0 0.0
    %372 = vmatpush.msra.mxu0 0.0
    %373 = vmatpush.msra.mxu0 0.0
    %374 = vmatpush.msra.mxu0 0.0
    %375 = vmatpush.msra.mxu0 0.0
    %376 = vmatpush.msra.mxu0 0.0
    %377 = vmatpush.msra.mxu0 0.0
    %378 = vmatpush.msra.mxu0 0.0
    %379 = vmatpush.msra.mxu0 0.0
    %380 = vmatpush.msra.mxu0 %v367
    %381 = vmatpush.msra.mxu0 %v366
    %382 = vmatpush.msra.mxu0 %v365
    %383 = vmatpush.msra.mxu0 %v364
    %384 = vmatmul.f32.gmra.mxu0 %v180
    %v385 = vpop.f32.mrf.mxu0
    %v386 = vadd.f32 0.0, %v385
    %387 = vmatmul.f32.gmra.mxu0 %v183
    %v388 = vpop.f32.mrf.mxu0
    %v389 = vadd.f32 0.0, %v388
    %390 = vmatmul.f32.gmra.mxu0 %v186
    %v391 = vpop.f32.mrf.mxu0
    %v392 = vadd.f32 0.0, %v391
    %393 = vmatmul.f32.gmra.mxu0 %v189
    %v394 = vpop.f32.mrf.mxu0
    %v395 = vadd.f32 0.0, %v394
    %396 = vdwg.mxu0
    %s397 = scalar_lea.vmem [#allocation10], 256
    %v398 = vld [vmem:[%s397] sm:$0xff]
    %v399 = vld [vmem:[%s397 + $0x8] sm:$0xff]
    %v400 = vld [vmem:[%s397 + $0x10] sm:$0xff]
    %v401 = vld [vmem:[%s397 + $0x18] sm:$0xff]
    %v402 = vld [vmem:[%s397 + $0x20] sm:$0xff]
    %v403 = vld [vmem:[%s397 + $0x28] sm:$0xff]
    %v404 = vld [vmem:[%s397 + $0x30] sm:$0xff]
    %v405 = vld [vmem:[%s397 + $0x38] sm:$0xff]
    %v406 = vld [vmem:[%s397 + $0x40] sm:$0xff]
    %v407 = vld [vmem:[%s397 + $0x48] sm:$0xff]
    %v408 = vld [vmem:[%s397 + $0x50] sm:$0xff]
    %v409 = vld [vmem:[%s397 + $0x58] sm:$0xff]
    %v410 = vld [vmem:[%s397 + $0x60] sm:$0xff]
    %v411 = vld [vmem:[%s397 + $0x68] sm:$0xff]
    %v412 = vld [vmem:[%s397 + $0x70] sm:$0xff]
    %v413 = vld [vmem:[%s397 + $0x78] sm:$0xff]
    %414 = vmatpush.msra.mxu0 %v413
    %415 = vmatpush.msra.mxu0 %v412
    %416 = vmatpush.msra.mxu0 %v411
    %417 = vmatpush.msra.mxu0 %v410
    %418 = vmatpush.msra.mxu0 %v409
    %419 = vmatpush.msra.mxu0 %v408
    %420 = vmatpush.msra.mxu0 %v407
    %421 = vmatpush.msra.mxu0 %v406
    %422 = vmatpush.msra.mxu0 %v405
    %423 = vmatpush.msra.mxu0 %v404
    %424 = vmatpush.msra.mxu0 %v403
    %425 = vmatpush.msra.mxu0 %v402
    %426 = vmatpush.msra.mxu0 %v401
    %427 = vmatpush.msra.mxu0 %v400
    %428 = vmatpush.msra.mxu0 %v399
    %429 = vmatpush.msra.mxu0 %v398
    %430 = vmatmul.f32.gmra.mxu0 %v386
    %v431 = vpop.f32.mrf.mxu0
    %v432 = vadd.f32 0.0, %v431
    %433 = vmatmul.f32.gmra.mxu0 %v389
    %v434 = vpop.f32.mrf.mxu0
    %v435 = vadd.f32 0.0, %v434
    %436 = vmatmul.f32.gmra.mxu0 %v392
    %v437 = vpop.f32.mrf.mxu0
    %v438 = vadd.f32 0.0, %v437
    %439 = vmatmul.f32.gmra.mxu0 %v395
    %v440 = vpop.f32.mrf.mxu0
    %v441 = vadd.f32 0.0, %v440
    %442 = vdwg.mxu0
    %v443 = vadd.f32 %v354, %v432
    %v444 = vadd.f32 %v355, %v435
    %v445 = vadd.f32 %v356, %v438
    %v446 = vadd.f32 %v357, %v441
    %v447 = vld [vmem:[#allocation12] sm:$0xff]
    %v448 = vld [vmem:[#allocation12 + $0x8] sm:$0xff]
    %v449 = vld [vmem:[#allocation12 + $0x10] sm:$0xff]
    %v450 = vld [vmem:[#allocation12 + $0x18] sm:$0xff]
    %v451 = vld [vmem:[#allocation12 + $0x20] sm:$0xff]
    %v452 = vld [vmem:[#allocation12 + $0x28] sm:$0xff]
    %v453 = vld [vmem:[#allocation12 + $0x30] sm:$0xff]
    %v454 = vld [vmem:[#allocation12 + $0x38] sm:$0xff]
    %v455 = vld [vmem:[#allocation12 + $0x40] sm:$0xff]
    %v456 = vld [vmem:[#allocation12 + $0x48] sm:$0xff]
    %v457 = vld [vmem:[#allocation12 + $0x50] sm:$0xff]
    %v458 = vld [vmem:[#allocation12 + $0x58] sm:$0xff]
    %v459 = vld [vmem:[#allocation12 + $0x60] sm:$0xff]
    %v460 = vld [vmem:[#allocation12 + $0x68] sm:$0xff]
    %v461 = vld [vmem:[#allocation12 + $0x70] sm:$0xff]
    %v462 = vld [vmem:[#allocation12 + $0x78] sm:$0xff]
    %v463 = vld [vmem:[%s7] sm:$0x1]
    %v465 = vperm.slane %v463, 0
    %467 = vmatpush.msra.mxu0 %v462
    %468 = vmatpush.msra.mxu0 %v461
    %469 = vmatpush.msra.mxu0 %v460
    %470 = vmatpush.msra.mxu0 %v459
    %471 = vmatpush.msra.mxu0 %v458
    %472 = vmatpush.msra.mxu0 %v457
    %473 = vmatpush.msra.mxu0 %v456
    %474 = vmatpush.msra.mxu0 %v455
    %475 = vmatpush.msra.mxu0 %v454
    %476 = vmatpush.msra.mxu0 %v453
    %477 = vmatpush.msra.mxu0 %v452
    %478 = vmatpush.msra.mxu0 %v451
    %479 = vmatpush.msra.mxu0 %v450
    %480 = vmatpush.msra.mxu0 %v449
    %481 = vmatpush.msra.mxu0 %v448
    %482 = vmatpush.msra.mxu0 %v447
    %483 = vmatmul.f32.gmra.mxu0 %v443
    %v484 = vpop.f32.mrf.mxu0
    %v485 = vadd.f32 %v465, %v484
    %486 = vmatmul.f32.gmra.mxu0 %v444
    %v487 = vpop.f32.mrf.mxu0
    %v488 = vadd.f32 %v465, %v487
    %489 = vmatmul.f32.gmra.mxu0 %v445
    %v490 = vpop.f32.mrf.mxu0
    %v491 = vadd.f32 %v465, %v490
    %492 = vmatmul.f32.gmra.mxu0 %v446
    %v493 = vpop.f32.mrf.mxu0
    %v494 = vadd.f32 %v465, %v493
    %495 = vdwg.mxu0
    %496 = vmax.xlane.f32.xlu0 %v485
    %v497 = vpop.xlane.xlu0 %496
    %498 = vmax.xlane.f32.xlu0 %v488
    %v499 = vpop.xlane.xlu0 %498
    %500 = vmax.xlane.f32.xlu0 %v491
    %v501 = vpop.xlane.xlu0 %500
    %502 = vmax.xlane.f32.xlu0 %v494
    %v503 = vpop.xlane.xlu0 %502
    %v504 = vsub.f32 %v485, %v497
    %v505 = vsub.f32 %v488, %v499
    %v506 = vsub.f32 %v491, %v501
    %v507 = vsub.f32 %v494, %v503
    %v508 = vmul.f32 %v504, 1.442695
    %v509 = vpow.pop %v508
    %v510 = vmul.f32 %v505, 1.442695
    %v511 = vpow.pop %v510
    %v512 = vmul.f32 %v506, 1.442695
    %v513 = vpow.pop %v512
    %v514 = vmul.f32 %v507, 1.442695
    %v515 = vpow.pop %v514
    %516 = vadd.xlane.f32.xlu0 %v509
    %v517 = vpop.xlane.xlu0 %516
    %518 = vadd.xlane.f32.xlu0 %v511
    %v519 = vpop.xlane.xlu0 %518
    %520 = vadd.xlane.f32.xlu0 %v513
    %v521 = vpop.xlane.xlu0 %520
    %522 = vadd.xlane.f32.xlu0 %v515
    %v523 = vpop.xlane.xlu0 %522
    %v524 = vlog2.pop %v517
    %v525 = vmul.f32 %v524, 0.6931472
    %v526 = vlog2.pop %v519
    %v527 = vmul.f32 %v526, 0.6931472
    %v528 = vlog2.pop %v521
    %v529 = vmul.f32 %v528, 0.6931472
    %v530 = vlog2.pop %v523
    %v531 = vmul.f32 %v530, 0.6931472
    %v532 = vsub.f32 %v504, %v525
    %v533 = vsub.f32 %v505, %v527
    %v534 = vsub.f32 %v506, %v529
    %v535 = vsub.f32 %v507, %v531
    %536 = vst [vmem:[#allocation13] sm:$0xff] %v532
    %537 = vst [vmem:[#allocation13 + $0x8] sm:$0xff] %v533
    %538 = vst [vmem:[#allocation13 + $0x10] sm:$0xff] %v534
    %539 = vst [vmem:[#allocation13 + $0x18] sm:$0xff] %v535
    // Predicated region
    $region58: #{tpu_custom_call.1} parent=1 // pred_check
      _
    $region59: #{tpu_custom_call.1} parent=1 // pred_check_branch
      %541 = sbr.rel (0) target = $region61
    $region60: #{tpu_custom_call.1} parent=1 // pred_region
      %543 = vsyncadd [#allocation4], 0
      %s544 = sshll.u32 [#allocation13], 4
      %s545 = int_to_ptr.vmem [resolvable:$true] %s544
      %s546 = sshll.u32 %s8, 4
      %s547 = int_to_ptr.hbm [resolvable:$true] %s546
      %552 = dma.vmem_to_hbm [thread:$0]  %s545, 512, %s547, [#allocation4], 128, 128, 8
    $region61: #{tpu_custom_call.1} parent=1 // pred_fallthru
      _
    // Predicated region
    $region62: #{tpu_custom_call.1} parent=1 // pred_check
      _
    $region63: #{tpu_custom_call.1} parent=1 // pred_check_branch
      %554 = sbr.rel (0) target = $region65
    $region64: #{tpu_custom_call.1} parent=1 // pred_region
      %556 = dma.done [#allocation4], 512
    $region65: #{tpu_custom_call.1} parent=1 // pred_fallthru
      _
    %557 = vsyncpa [#allocation3], 1
    %558 = vsyncpa [#allocation8], 1
    %559 = vsyncpa [#allocation11], 1
    %560 = vsyncpa [#allocation4], 1
    %561 = vsyncpa [#allocation5], 1

</llo_original>
